<compile_context>
chip_gen: v7x
topology: tpu7x:2x2x1
jax: 0.10.0
libtpu: 0.0.40
codegen_flags: <defaults>
</compile_context>

<pallas_src>
import functools

import jax
import jax.numpy as jnp
from jax import lax
from jax.experimental import pallas as pl
from jax.experimental.pallas import tpu as pltpu


def _round_up(x, m):
    return (x + m - 1) // m * m


# --------------------------------------------------------------------------
# Fused kernel: chunk input projection + sequential recurrence.
#   grid = (batch_blocks, time_chunks); the output block index is constant
#   along the time axis, so o_ref is the resident hidden-state accumulator.
# --------------------------------------------------------------------------
def _rnn_kernel(x_ref, whx_ref, bias_ref, whh_ref, o_ref, xw_ref, *,
                total_steps, mask_tail, mxu_dtype):
    t = pl.program_id(1)

    @pl.when(t == 0)
    def _():
        o_ref[...] = jnp.zeros_like(o_ref)          # h_0 = 0 for this block

    Tc, tb, Dp = x_ref.shape                        # static
    Hp = whh_ref.shape[1]

    # Fused per-chunk input projection: one (Tc*tb, Dp) @ (Dp, Hp) MXU matmul
    # (bf16 operands, f32 accumulation); folded bias added once.  The merge
    # of the leading dims is tile-aligned (tb is a sublane multiple).
    x2 = x_ref[...].reshape(Tc * tb, Dp)
    xw = jnp.dot(x2, whx_ref[...], preferred_element_type=jnp.float32)
    xw_ref[...] = (xw + bias_ref[...]).reshape(Tc, tb, Hp)

    h = o_ref[...]                                  # (tb, Hp) f32 carried state
    whh = whh_ref[...]                              # (Hp, Hp) bf16, invariant

    def step(i, h):
        # single matmul + add + tanh per timestep (input projection hoisted);
        # only the dot operands are cast, carried h / tanh math stay f32.
        hh = jnp.dot(h.astype(mxu_dtype), whh,
                     preferred_element_type=jnp.float32)
        h_new = jnp.tanh(xw_ref[i] + hh)
        if mask_tail:
            # keep previous h on padded (beyond-T) timesteps of the last chunk
            h_new = jnp.where(t * Tc + i < total_steps, h_new, h)
        return h_new

    # TODO(synk): if the bundle dump shows vld/vst spill pressure for very
    # large tb*Hp, drop to partial unroll (unroll=4) and index xw_ref via a
    # dynamic slice — kept fully unrolled here for scheduler visibility.
    h = lax.fori_loop(0, Tc, step, h, unroll=True)
    o_ref[...] = h.astype(o_ref.dtype)


# --------------------------------------------------------------------------
# Wrapper
# --------------------------------------------------------------------------
def rnn_forward(x, whx, whh, bhx, bhh, *, time_chunk=8, batch_tile=256,
                mxu_dtype=jnp.bfloat16):
    """x: [T, B, D] f32; weights stored [in, out]; returns h_T : [B, H]."""
    T, B, D = x.shape
    Dw, H = whx.shape
    assert Dw == D, "Whx must be (input_dim, hidden_dim)"
    # Faithful to the PyTorch module: hh is Linear(input_dim, hidden_dim)
    # applied to the hidden state, so input_dim must equal hidden_dim.
    assert whh.shape == (H, H) and D == H, "module requires input_dim == hidden_dim"

    f32 = jnp.float32

    # ---- pad to TPU-friendly shapes ----
    Bp = _round_up(B, 16)            # 16: bf16 sublane packing
    Dp = _round_up(D, 128)
    Hp = _round_up(H, 128)

    # Batch tile: fill the MXU rows (256 default; use 128 on v5e if desired).
    tb = min(Bp, max(16, _round_up(batch_tile, 16)))
    Bp = _round_up(Bp, tb)

    # Time chunk: pad T up instead of shrinking to tiny divisors.
    Tc = max(1, min(T, time_chunk))
    Tp = _round_up(T, Tc)

    xp = jnp.zeros((Tp, Bp, Dp), mxu_dtype).at[:T, :B, :D].set(x.astype(mxu_dtype))
    whx_p = jnp.zeros((Dp, Hp), mxu_dtype).at[:D, :H].set(whx.astype(mxu_dtype))
    whh_p = jnp.zeros((Hp, Hp), mxu_dtype).at[:H, :H].set(whh.astype(mxu_dtype))
    # fold the two biases into a single f32 vector (added post-accumulation)
    bias_p = jnp.zeros((1, Hp), f32).at[:, :H].set(
        jnp.asarray(bhx + bhh, f32).reshape(1, H))

    kernel = functools.partial(_rnn_kernel, total_steps=T,
                               mask_tail=(Tp != T), mxu_dtype=mxu_dtype)

    h_pad = pl.pallas_call(
        kernel,
        out_shape=jax.ShapeDtypeStruct((Bp, Hp), f32),
        grid_spec=pltpu.PrefetchScalarGridSpec(
            num_scalar_prefetch=0,
            grid=(Bp // tb, Tp // Tc),                              # (batch, time)
            in_specs=[
                pl.BlockSpec((Tc, tb, Dp), lambda b, t: (t, b, 0)),  # x chunk
                pl.BlockSpec((Dp, Hp), lambda b, t: (0, 0),
                             pipeline_mode=pl.Buffered(1)),          # Whx (resident)
                pl.BlockSpec((1, Hp), lambda b, t: (0, 0),
                             pipeline_mode=pl.Buffered(1)),          # folded bias
                pl.BlockSpec((Hp, Hp), lambda b, t: (0, 0),
                             pipeline_mode=pl.Buffered(1)),          # Whh (resident)
            ],
            out_specs=pl.BlockSpec((tb, Hp), lambda b, t: (b, 0)),   # resident h
            scratch_shapes=[pltpu.VMEM((Tc, tb, Hp), f32)],          # xw chunk
        ),
        compiler_params=pltpu.CompilerParams(
            # batch blocks are independent (megacore); time is sequential
            dimension_semantics=("parallel", "arbitrary"),
            # default scoped VMEM is 16 MiB (v5e) / 32 MiB (v6e, v7x)
            vmem_limit_bytes=64 * 1024 * 1024,
        ),
    )(xp, whx_p, bias_p, whh_p)

    return h_pad[:B, :H]


# --------------------------------------------------------------------------
# Params / reference
# --------------------------------------------------------------------------
def init_params(key, input_dim, hidden_dim):
    """Mimics nn.Linear default init (U[-1/sqrt(fan_in), +1/sqrt(fan_in)])."""
    assert input_dim == hidden_dim, "module requires input_dim == hidden_dim"
    k1, k2, k3, k4 = jax.random.split(key, 4)
    bound = 1.0 / (input_dim ** 0.5)
    # stored as [in, out] (transposed vs. torch Linear.weight)
    whx = jax.random.uniform(k1, (input_dim, hidden_dim), jnp.float32, -bound, bound)
    whh = jax.random.uniform(k2, (input_dim, hidden_dim), jnp.float32, -bound, bound)
    bhx = jax.random.uniform(k3, (1, hidden_dim), jnp.float32, -bound, bound)
    bhh = jax.random.uniform(k4, (1, hidden_dim), jnp.float32, -bound, bound)
    return whx, whh, bhx, bhh


def rnn_reference(x, whx, whh, bhx, bhh):
    """Pure-JAX f32 reference of the PyTorch forward."""
    T, B, D = x.shape
    H = whx.shape[1]
    h = jnp.zeros((B, H), jnp.float32)
    for t in range(T):
        h = jnp.tanh(x[t] @ whx + bhx + h @ whh + bhh)
    return h


if __name__ == "__main__":
    # Small shapes consistent with the module: seq=8, batch=2, dim=hidden=32.
    T, B, D, H = 8, 2, 32, 32

    key = jax.random.PRNGKey(0)
    kx, kp = jax.random.split(key)
    x = jax.random.normal(kx, (T, B, D), jnp.float32)
    whx, whh, bhx, bhh = init_params(kp, D, H)

    out = rnn_forward(x, whx, whh, bhx, bhh)
    out = jax.block_until_ready(out)

    ref = rnn_reference(x, whx, whh, bhx, bhh)
    assert out.shape == (B, H)
    # bf16 MXU operands compound small errors across the T-step recurrence,
    # so the tolerance vs. the exact-f32 reference is loosened accordingly.
    assert jnp.allclose(out, ref, atol=5e-2, rtol=5e-2), "mismatch vs reference"

    print("KERNEL_OK")
</pallas_src>

<mosaic_0001>
module attributes {stable_mosaic.version = 11 : i64} {
  func.func @_rnn_kernel(%arg0: i32, %arg1: i32, %arg2: memref<8x16x128xbf16, #tpu.memory_space<vmem>>, %arg3: memref<128x128xbf16, #tpu.memory_space<vmem>>, %arg4: memref<1x128xf32, #tpu.memory_space<vmem>>, %arg5: memref<128x128xbf16, #tpu.memory_space<vmem>>, %arg6: memref<16x128xf32, #tpu.memory_space<vmem>>, %arg7: memref<8x16x128xf32, #tpu.memory_space<vmem>>) attributes {dimension_semantics = [#tpu.dimension_semantics<parallel>, #tpu.dimension_semantics<arbitrary>], iteration_bounds = array<i64: 1, 1>, scalar_prefetch = 0 : i64, scratch_operands = 1 : i64, tpu.core_type = #tpu.core_type<tc>, window_params = [{transform_indices = @transform_0, window_bounds = array<i64: 8, 16, 128>}, {pipeline_mode = #tpu.pipeline_mode<synchronous>, transform_indices = @transform_1, window_bounds = array<i64: 128, 128>}, {pipeline_mode = #tpu.pipeline_mode<synchronous>, transform_indices = @transform_2, window_bounds = array<i64: 1, 128>}, {pipeline_mode = #tpu.pipeline_mode<synchronous>, transform_indices = @transform_3, window_bounds = array<i64: 128, 128>}, {transform_indices = @transform_4, window_bounds = array<i64: 16, 128>}]} {
    %c0_i32 = arith.constant 0 : i32
    %0 = arith.cmpi eq, %arg1, %c0_i32 : i32
    %1 = arith.extui %0 : i1 to i32
    %c0_i32_0 = arith.constant 0 : i32
    %2 = arith.cmpi ne, %1, %c0_i32_0 : i32
    scf.if %2 {
      %cst_41 = arith.constant 0.000000e+00 : f32
      %71 = vector.broadcast %cst_41 : f32 to vector<16x128xf32>
      %c0_42 = arith.constant 0 : index
      %c0_43 = arith.constant 0 : index
      %72 = vector.load %arg6[%c0_42, %c0_43] : memref<16x128xf32, #tpu.memory_space<vmem>>, vector<16x128xf32>
      tpu.vector_store %arg6[%c0_42, %c0_43], %71 {strides = array<i32>} : memref<16x128xf32, #tpu.memory_space<vmem>>, vector<16x128xf32>,
    } else {
    }
    %c0 = arith.constant 0 : index
    %c0_1 = arith.constant 0 : index
    %c0_2 = arith.constant 0 : index
    %3 = vector.load %arg2[%c0, %c0_1, %c0_2] : memref<8x16x128xbf16, #tpu.memory_space<vmem>>, vector<8x16x128xbf16>
    %4 = vector.shape_cast %3 : vector<8x16x128xbf16> to vector<128x128xbf16>
    %c0_3 = arith.constant 0 : index
    %c0_4 = arith.constant 0 : index
    %5 = vector.load %arg3[%c0_3, %c0_4] : memref<128x128xbf16, #tpu.memory_space<vmem>>, vector<128x128xbf16>
    %cst = arith.constant dense<0.000000e+00> : vector<128x128xf32>
    %6 = tpu.matmul %4, %5, %cst {dimension_numbers = #tpu.dot_dimension_numbers<[1], [0], [0], [1], [0, 0, 1, 1], [], []>} : vector<128x128xbf16>, vector<128x128xbf16>, vector<128x128xf32> -> vector<128x128xf32>
    %c0_5 = arith.constant 0 : index
    %c0_6 = arith.constant 0 : index
    %7 = vector.load %arg4[%c0_5, %c0_6] : memref<1x128xf32, #tpu.memory_space<vmem>>, vector<1x128xf32>
    %8 = vector.broadcast %7 : vector<1x128xf32> to vector<128x128xf32>
    %9 = arith.addf %6, %8 : vector<128x128xf32>
    %10 = vector.shape_cast %9 : vector<128x128xf32> to vector<8x16x128xf32>
    %c0_7 = arith.constant 0 : index
    %c0_8 = arith.constant 0 : index
    %c0_9 = arith.constant 0 : index
    %11 = vector.load %arg7[%c0_7, %c0_8, %c0_9] : memref<8x16x128xf32, #tpu.memory_space<vmem>>, vector<8x16x128xf32>
    tpu.vector_store %arg7[%c0_7, %c0_8, %c0_9], %10 {strides = array<i32>} : memref<8x16x128xf32, #tpu.memory_space<vmem>>, vector<8x16x128xf32>,
    %c0_10 = arith.constant 0 : index
    %c0_11 = arith.constant 0 : index
    %12 = vector.load %arg6[%c0_10, %c0_11] : memref<16x128xf32, #tpu.memory_space<vmem>>, vector<16x128xf32>
    %c0_12 = arith.constant 0 : index
    %c0_13 = arith.constant 0 : index
    %13 = vector.load %arg5[%c0_12, %c0_13] : memref<128x128xbf16, #tpu.memory_space<vmem>>, vector<128x128xbf16>
    %c0_i32_14 = arith.constant 0 : i32
    %14 = arith.truncf %12 : vector<16x128xf32> to vector<16x128xbf16>
    %cst_15 = arith.constant dense<0.000000e+00> : vector<16x128xf32>
    %15 = tpu.matmul %14, %13, %cst_15 {dimension_numbers = #tpu.dot_dimension_numbers<[1], [0], [0], [1], [0, 0, 1, 1], [], []>} : vector<16x128xbf16>, vector<128x128xbf16>, vector<16x128xf32> -> vector<16x128xf32>
    %16 = arith.index_cast %c0_i32_14 : i32 to index
    %c0_16 = arith.constant 0 : index
    %c0_17 = arith.constant 0 : index
    %17 = vector.load %arg7[%16, %c0_16, %c0_17] : memref<8x16x128xf32, #tpu.memory_space<vmem>>, vector<1x16x128xf32>
    %18 = vector.shape_cast %17 : vector<1x16x128xf32> to vector<16x128xf32>
    %19 = arith.addf %18, %15 : vector<16x128xf32>
    %20 = math.tanh %19 : vector<16x128xf32>
    %c1_i32 = arith.constant 1 : i32
    %21 = arith.truncf %20 : vector<16x128xf32> to vector<16x128xbf16>
    %cst_18 = arith.constant dense<0.000000e+00> : vector<16x128xf32>
    %22 = tpu.matmul %21, %13, %cst_18 {dimension_numbers = #tpu.dot_dimension_numbers<[1], [0], [0], [1], [0, 0, 1, 1], [], []>} : vector<16x128xbf16>, vector<128x128xbf16>, vector<16x128xf32> -> vector<16x128xf32>
    %23 = arith.index_cast %c1_i32 : i32 to index
    %c0_19 = arith.constant 0 : index
    %c0_20 = arith.constant 0 : index
    %24 = vector.load %arg7[%23, %c0_19, %c0_20] : memref<8x16x128xf32, #tpu.memory_space<vmem>>, vector<1x16x128xf32>
    %25 = vector.shape_cast %24 : vector<1x16x128xf32> to vector<16x128xf32>
    %26 = arith.addf %25, %22 : vector<16x128xf32>
    %27 = math.tanh %26 : vector<16x128xf32>
    %c2_i32 = arith.constant 2 : i32
    %28 = arith.truncf %27 : vector<16x128xf32> to vector<16x128xbf16>
    %cst_21 = arith.constant dense<0.000000e+00> : vector<16x128xf32>
    %29 = tpu.matmul %28, %13, %cst_21 {dimension_numbers = #tpu.dot_dimension_numbers<[1], [0], [0], [1], [0, 0, 1, 1], [], []>} : vector<16x128xbf16>, vector<128x128xbf16>, vector<16x128xf32> -> vector<16x128xf32>
    %30 = arith.index_cast %c2_i32 : i32 to index
    %c0_22 = arith.constant 0 : index
    %c0_23 = arith.constant 0 : index
    %31 = vector.load %arg7[%30, %c0_22, %c0_23] : memref<8x16x128xf32, #tpu.memory_space<vmem>>, vector<1x16x128xf32>
    %32 = vector.shape_cast %31 : vector<1x16x128xf32> to vector<16x128xf32>
    %33 = arith.addf %32, %29 : vector<16x128xf32>
    %34 = math.tanh %33 : vector<16x128xf32>
    %c3_i32 = arith.constant 3 : i32
    %35 = arith.truncf %34 : vector<16x128xf32> to vector<16x128xbf16>
    %cst_24 = arith.constant dense<0.000000e+00> : vector<16x128xf32>
    %36 = tpu.matmul %35, %13, %cst_24 {dimension_numbers = #tpu.dot_dimension_numbers<[1], [0], [0], [1], [0, 0, 1, 1], [], []>} : vector<16x128xbf16>, vector<128x128xbf16>, vector<16x128xf32> -> vector<16x128xf32>
    %37 = arith.index_cast %c3_i32 : i32 to index
    %c0_25 = arith.constant 0 : index
    %c0_26 = arith.constant 0 : index
    %38 = vector.load %arg7[%37, %c0_25, %c0_26] : memref<8x16x128xf32, #tpu.memory_space<vmem>>, vector<1x16x128xf32>
    %39 = vector.shape_cast %38 : vector<1x16x128xf32> to vector<16x128xf32>
    %40 = arith.addf %39, %36 : vector<16x128xf32>
    %41 = math.tanh %40 : vector<16x128xf32>
    %c4_i32 = arith.constant 4 : i32
    %42 = arith.truncf %41 : vector<16x128xf32> to vector<16x128xbf16>
    %cst_27 = arith.constant dense<0.000000e+00> : vector<16x128xf32>
    %43 = tpu.matmul %42, %13, %cst_27 {dimension_numbers = #tpu.dot_dimension_numbers<[1], [0], [0], [1], [0, 0, 1, 1], [], []>} : vector<16x128xbf16>, vector<128x128xbf16>, vector<16x128xf32> -> vector<16x128xf32>
    %44 = arith.index_cast %c4_i32 : i32 to index
    %c0_28 = arith.constant 0 : index
    %c0_29 = arith.constant 0 : index
    %45 = vector.load %arg7[%44, %c0_28, %c0_29] : memref<8x16x128xf32, #tpu.memory_space<vmem>>, vector<1x16x128xf32>
    %46 = vector.shape_cast %45 : vector<1x16x128xf32> to vector<16x128xf32>
    %47 = arith.addf %46, %43 : vector<16x128xf32>
    %48 = math.tanh %47 : vector<16x128xf32>
    %c5_i32 = arith.constant 5 : i32
    %49 = arith.truncf %48 : vector<16x128xf32> to vector<16x128xbf16>
    %cst_30 = arith.constant dense<0.000000e+00> : vector<16x128xf32>
    %50 = tpu.matmul %49, %13, %cst_30 {dimension_numbers = #tpu.dot_dimension_numbers<[1], [0], [0], [1], [0, 0, 1, 1], [], []>} : vector<16x128xbf16>, vector<128x128xbf16>, vector<16x128xf32> -> vector<16x128xf32>
    %51 = arith.index_cast %c5_i32 : i32 to index
    %c0_31 = arith.constant 0 : index
    %c0_32 = arith.constant 0 : index
    %52 = vector.load %arg7[%51, %c0_31, %c0_32] : memref<8x16x128xf32, #tpu.memory_space<vmem>>, vector<1x16x128xf32>
    %53 = vector.shape_cast %52 : vector<1x16x128xf32> to vector<16x128xf32>
    %54 = arith.addf %53, %50 : vector<16x128xf32>
    %55 = math.tanh %54 : vector<16x128xf32>
    %c6_i32 = arith.constant 6 : i32
    %56 = arith.truncf %55 : vector<16x128xf32> to vector<16x128xbf16>
    %cst_33 = arith.constant dense<0.000000e+00> : vector<16x128xf32>
    %57 = tpu.matmul %56, %13, %cst_33 {dimension_numbers = #tpu.dot_dimension_numbers<[1], [0], [0], [1], [0, 0, 1, 1], [], []>} : vector<16x128xbf16>, vector<128x128xbf16>, vector<16x128xf32> -> vector<16x128xf32>
    %58 = arith.index_cast %c6_i32 : i32 to index
    %c0_34 = arith.constant 0 : index
    %c0_35 = arith.constant 0 : index
    %59 = vector.load %arg7[%58, %c0_34, %c0_35] : memref<8x16x128xf32, #tpu.memory_space<vmem>>, vector<1x16x128xf32>
    %60 = vector.shape_cast %59 : vector<1x16x128xf32> to vector<16x128xf32>
    %61 = arith.addf %60, %57 : vector<16x128xf32>
    %62 = math.tanh %61 : vector<16x128xf32>
    %c7_i32 = arith.constant 7 : i32
    %63 = arith.truncf %62 : vector<16x128xf32> to vector<16x128xbf16>
    %cst_36 = arith.constant dense<0.000000e+00> : vector<16x128xf32>
    %64 = tpu.matmul %63, %13, %cst_36 {dimension_numbers = #tpu.dot_dimension_numbers<[1], [0], [0], [1], [0, 0, 1, 1], [], []>} : vector<16x128xbf16>, vector<128x128xbf16>, vector<16x128xf32> -> vector<16x128xf32>
    %65 = arith.index_cast %c7_i32 : i32 to index
    %c0_37 = arith.constant 0 : index
    %c0_38 = arith.constant 0 : index
    %66 = vector.load %arg7[%65, %c0_37, %c0_38] : memref<8x16x128xf32, #tpu.memory_space<vmem>>, vector<1x16x128xf32>
    %67 = vector.shape_cast %66 : vector<1x16x128xf32> to vector<16x128xf32>
    %68 = arith.addf %67, %64 : vector<16x128xf32>
    %69 = math.tanh %68 : vector<16x128xf32>
    %c8_i32 = arith.constant 8 : i32
    %c0_39 = arith.constant 0 : index
    %c0_40 = arith.constant 0 : index
    %70 = vector.load %arg6[%c0_39, %c0_40] : memref<16x128xf32, #tpu.memory_space<vmem>>, vector<16x128xf32>
    tpu.vector_store %arg6[%c0_39, %c0_40], %69 {strides = array<i32>} : memref<16x128xf32, #tpu.memory_space<vmem>>, vector<16x128xf32>,
    return
  }
  func.func @transform_0(%arg0: i32, %arg1: i32) -> (i32, i32, i32) {
    %c0_i32 = arith.constant 0 : i32
    %c0_i32_0 = arith.constant 0 : i32
    return %arg1, %arg0, %c0_i32 : i32, i32, i32
  }
  func.func @transform_1(%arg0: i32, %arg1: i32) -> (i32, i32) {
    %c0_i32 = arith.constant 0 : i32
    %c0_i32_0 = arith.constant 0 : i32
    %c0_i32_1 = arith.constant 0 : i32
    return %c0_i32, %c0_i32_0 : i32, i32
  }
  func.func @transform_2(%arg0: i32, %arg1: i32) -> (i32, i32) {
    %c0_i32 = arith.constant 0 : i32
    %c0_i32_0 = arith.constant 0 : i32
    %c0_i32_1 = arith.constant 0 : i32
    return %c0_i32, %c0_i32_0 : i32, i32
  }
  func.func @transform_3(%arg0: i32, %arg1: i32) -> (i32, i32) {
    %c0_i32 = arith.constant 0 : i32
    %c0_i32_0 = arith.constant 0 : i32
    %c0_i32_1 = arith.constant 0 : i32
    return %c0_i32, %c0_i32_0 : i32, i32
  }
  func.func @transform_4(%arg0: i32, %arg1: i32) -> (i32, i32) {
    %c0_i32 = arith.constant 0 : i32
    %c0_i32_0 = arith.constant 0 : i32
    return %arg0, %c0_i32 : i32, i32
  }
}

</mosaic_0001>

<llo_original>
// kernel: tpu_custom_call.1
$region0: #{tpu_custom_call.1}
  #allocation0 [shape = 'u32[]', space=smem, size = 0x4, offset = 0x4, fixed_abs, tag = 'smem constant byte address 0x4 - core index']
  #allocation1 [shape = 'u32[144,128]{1,0:T(1,128)}', space=vmem, size = 0x12000, scoped, tag = 'internal scratch']
  #allocation2 [shape = 'f32[8,16,128]{2,1,0:T(8,128)}', space=vmem, size = 0x10000, scoped, tag = 'scratch operand']
  %s0 = inlined_call_operand.hbm [shape: bf16[8,16,128], index: 0, kind: input, shape index: {}]
  %s1 = inlined_call_operand.hbm [shape: bf16[128,128], index: 1, kind: input, shape index: {}]
  %s2 = inlined_call_operand.hbm [shape: f32[1,128], index: 2, kind: input, shape index: {}]
  %s3 = inlined_call_operand.hbm [shape: bf16[128,128], index: 3, kind: input, shape index: {}]
  %s4 = inlined_call_operand.hbm [shape: f32[16,128], index: 4, kind: output, shape index: {}]
  %s5 = sld [smem:[#allocation0]]
  $region46: #{tpu_custom_call.1} parent=0
    _
  %s7 = ssub.s32 1, %s5
  %s8 = scalar_select 0, %s7, %s5
  $region1: #{tpu_custom_call.1} parent=0
    #allocation3 [shape = 'u8[32768]{0}', space=vmem, size = 0x8000, scoped, tag = 'input window, operand 0, single buffered']
    #allocation4 [shape = 's32[1]{0}', space=sflag, size = 0x4, scoped, tag = 'scoped memory for tpu_custom_call.1']
    #allocation5 [shape = 's32[1]{0}', space=sflag, size = 0x4, scoped, tag = 'scoped memory for tpu_custom_call.1']
    #allocation6 [shape = 'u8[32768]{0}', space=vmem, size = 0x8000, scoped, tag = 'input window, operand 1, single buffered']
    #allocation7 [shape = 's32[1]{0}', space=sflag, size = 0x4, scoped, tag = 'scoped memory for tpu_custom_call.1']
    #allocation8 [shape = 'u8[512]{0}', space=vmem, size = 0x400, scoped, tag = 'input window, operand 2, single buffered']
    #allocation9 [shape = 'u8[32768]{0}', space=vmem, size = 0x8000, scoped, tag = 'input window, operand 3, single buffered']
    #allocation10 [shape = 's32[1]{0}', space=sflag, size = 0x4, scoped, tag = 'scoped memory for tpu_custom_call.1']
    #allocation11 [shape = 'u8[8192]{0}', space=vmem, size = 0x2000, scoped, tag = 'output window, operand 0, single buffered']
    %9 = vsyncpa [#allocation4], 0
    %10 = vsyncpa [#allocation7], 0
    %11 = vsyncpa [#allocation10], 0
    %12 = vsyncpa [#allocation5], 0
    // Predicated region
    $region2: #{tpu_custom_call.1} parent=1 // pred_check
      _
    $region3: #{tpu_custom_call.1} parent=1 // pred_check_branch
      %14 = sbr.rel (0) target = $region5
    $region4: #{tpu_custom_call.1} parent=1 // pred_region
      %s16 = ssub.s32 1024, 1024
      %17 = vsyncadd [#allocation4], %s16
      %s18 = sshll.u32 [#allocation3], 4
      %s19 = int_to_ptr.vmem [resolvable:$true] %s18
      %24 = dma.hbm_to_vmem [thread:$0]  %s0, 1024, %s19, [#allocation4], 64, 64, 4
    $region5: #{tpu_custom_call.1} parent=1 // pred_fallthru
      _
    // Predicated region
    $region6: #{tpu_custom_call.1} parent=1 // pred_check
      _
    $region7: #{tpu_custom_call.1} parent=1 // pred_check_branch
      %26 = sbr.rel (0) target = $region9
    $region8: #{tpu_custom_call.1} parent=1 // pred_region
      %s28 = ssub.s32 1024, 1024
      %29 = vsyncadd [#allocation7], %s28
      %s30 = sshll.u32 [#allocation6], 4
      %s31 = int_to_ptr.vmem [resolvable:$true] %s30
      %36 = dma.hbm_to_vmem [thread:$0]  %s1, 1024, %s31, [#allocation7], 64, 64, 4
    $region9: #{tpu_custom_call.1} parent=1 // pred_fallthru
      _
    // Predicated region
    $region10: #{tpu_custom_call.1} parent=1 // pred_check
      _
    $region11: #{tpu_custom_call.1} parent=1 // pred_check_branch
      %38 = sbr.rel (0) target = $region13
    $region12: #{tpu_custom_call.1} parent=1 // pred_region
      %s40 = ssub.s32 16, 16
      %41 = vsyncadd [#allocation7], %s40
      %s43 = sshll.u32 [#allocation8], 4
      %s44 = int_to_ptr.vmem [resolvable:$true] %s43
      %46 = dma.hbm_to_vmem [thread:$0]  %s2, 16, %s44, [#allocation7]
    $region13: #{tpu_custom_call.1} parent=1 // pred_fallthru
      _
    // Predicated region
    $region14: #{tpu_custom_call.1} parent=1 // pred_check
      _
    $region15: #{tpu_custom_call.1} parent=1 // pred_check_branch
      %48 = sbr.rel (0) target = $region17
    $region16: #{tpu_custom_call.1} parent=1 // pred_region
      %s50 = ssub.s32 1024, 1024
      %51 = vsyncadd [#allocation10], %s50
      %s52 = sshll.u32 [#allocation9], 4
      %s53 = int_to_ptr.vmem [resolvable:$true] %s52
      %58 = dma.hbm_to_vmem [thread:$0]  %s3, 1024, %s53, [#allocation10], 64, 64, 4
    $region17: #{tpu_custom_call.1} parent=1 // pred_fallthru
      _
    // Predicated region
    $region18: #{tpu_custom_call.1} parent=1 // pred_check
      _
    $region19: #{tpu_custom_call.1} parent=1 // pred_check_branch
      %60 = sbr.rel (0) target = $region21
    $region20: #{tpu_custom_call.1} parent=1 // pred_region
      %61 = dma.done [#allocation4], 1024
    $region21: #{tpu_custom_call.1} parent=1 // pred_fallthru
      _
    // Predicated region
    $region22: #{tpu_custom_call.1} parent=1 // pred_check
      _
    $region23: #{tpu_custom_call.1} parent=1 // pred_check_branch
      %63 = sbr.rel (0) target = $region25
    $region24: #{tpu_custom_call.1} parent=1 // pred_region
      %64 = dma.done [#allocation7], 1024
    $region25: #{tpu_custom_call.1} parent=1 // pred_fallthru
      _
    // Predicated region
    $region26: #{tpu_custom_call.1} parent=1 // pred_check
      _
    $region27: #{tpu_custom_call.1} parent=1 // pred_check_branch
      %66 = sbr.rel (0) target = $region29
    $region28: #{tpu_custom_call.1} parent=1 // pred_region
      %67 = dma.done [#allocation7], 16
    $region29: #{tpu_custom_call.1} parent=1 // pred_fallthru
      _
    // Predicated region
    $region30: #{tpu_custom_call.1} parent=1 // pred_check
      _
    $region31: #{tpu_custom_call.1} parent=1 // pred_check_branch
      %69 = sbr.rel (0) target = $region33
    $region32: #{tpu_custom_call.1} parent=1 // pred_region
      %70 = dma.done [#allocation10], 1024
    $region33: #{tpu_custom_call.1} parent=1 // pred_fallthru
      _
    %p72 = scmp.eq.s32.totalorder 0, 0
    // Predicated region
    $region34: #{tpu_custom_call.1} parent=1 // pred_check
      %p73 = pneg %p72
    $region35: #{tpu_custom_call.1} parent=1 // pred_check_branch
      %75 = sbr.rel (%p73) target = $region37
    $region36: #{tpu_custom_call.1} parent=1 // pred_region
      %76 = vst [vmem:[#allocation11] sm:$0xff] 0.0
      %77 = vst [vmem:[#allocation11 + $0x8] sm:$0xff] 0.0
    $region37: #{tpu_custom_call.1} parent=1 // pred_fallthru
      _
    %v78 = vld [vmem:[#allocation3] sm:$0xf]
    %v79 = vld [vmem:[#allocation3 + $0x4] sm:$0xf]
    %v80 = vld [vmem:[#allocation3 + $0x8] sm:$0xf]
    %v81 = vld [vmem:[#allocation3 + $0xc] sm:$0xf]
    %v82 = vld [vmem:[#allocation3 + $0x10] sm:$0xf]
    %v83 = vld [vmem:[#allocation3 + $0x14] sm:$0xf]
    %v84 = vld [vmem:[#allocation3 + $0x18] sm:$0xf]
    %v85 = vld [vmem:[#allocation3 + $0x1c] sm:$0xf]
    %v86 = vld [vmem:[#allocation3 + $0x20] sm:$0xf]
    %v87 = vld [vmem:[#allocation3 + $0x24] sm:$0xf]
    %v88 = vld [vmem:[#allocation3 + $0x28] sm:$0xf]
    %v89 = vld [vmem:[#allocation3 + $0x2c] sm:$0xf]
    %v90 = vld [vmem:[#allocation3 + $0x30] sm:$0xf]
    %v91 = vld [vmem:[#allocation3 + $0x34] sm:$0xf]
    %v92 = vld [vmem:[#allocation3 + $0x38] sm:$0xf]
    %v93 = vld [vmem:[#allocation3 + $0x3c] sm:$0xf]
    %v94 = vld [vmem:[#allocation6] sm:$0xf]
    %v95 = vld [vmem:[#allocation6 + $0x4] sm:$0xf]
    %v96 = vld [vmem:[#allocation6 + $0x8] sm:$0xf]
    %v97 = vld [vmem:[#allocation6 + $0xc] sm:$0xf]
    %v98 = vld [vmem:[#allocation6 + $0x10] sm:$0xf]
    %v99 = vld [vmem:[#allocation6 + $0x14] sm:$0xf]
    %v100 = vld [vmem:[#allocation6 + $0x18] sm:$0xf]
    %v101 = vld [vmem:[#allocation6 + $0x1c] sm:$0xf]
    %v102 = vld [vmem:[#allocation6 + $0x20] sm:$0xf]
    %v103 = vld [vmem:[#allocation6 + $0x24] sm:$0xf]
    %v104 = vld [vmem:[#allocation6 + $0x28] sm:$0xf]
    %v105 = vld [vmem:[#allocation6 + $0x2c] sm:$0xf]
    %v106 = vld [vmem:[#allocation6 + $0x30] sm:$0xf]
    %v107 = vld [vmem:[#allocation6 + $0x34] sm:$0xf]
    %v108 = vld [vmem:[#allocation6 + $0x38] sm:$0xf]
    %v109 = vld [vmem:[#allocation6 + $0x3c] sm:$0xf]
    %v110 = vld [vmem:[#allocation8] sm:$0x1]
    %v112 = vlaneseq
    %v113 = vshrl.u32 %v112, 7
    %v114 = vsub.s32 0, %v113
    %v115 = vrot.slane %v110, %v114
    %v133 = vunpack.c.l.b16 %v78
    %v134 = vunpack.c.l.b16 %v79
    %v135 = vunpack.c.l.b16 %v80
    %v136 = vunpack.c.l.b16 %v81
    %v137 = vunpack.c.l.b16 %v82
    %v138 = vunpack.c.l.b16 %v83
    %v139 = vunpack.c.l.b16 %v84
    %v140 = vunpack.c.l.b16 %v85
    %v141 = vunpack.c.l.b16 %v86
    %v142 = vunpack.c.l.b16 %v87
    %v143 = vunpack.c.l.b16 %v88
    %v144 = vunpack.c.l.b16 %v89
    %v145 = vunpack.c.l.b16 %v90
    %v146 = vunpack.c.l.b16 %v91
    %v147 = vunpack.c.l.b16 %v92
    %v148 = vunpack.c.l.b16 %v93
    %v149 = vpack.c.b16 %v134, %v133
    %v150 = vpack.c.b16 %v136, %v135
    %v151 = vpack.c.b16 %v138, %v137
    %v152 = vpack.c.b16 %v140, %v139
    %v153 = vpack.c.b16 %v142, %v141
    %v154 = vpack.c.b16 %v144, %v143
    %v155 = vpack.c.b16 %v146, %v145
    %v156 = vpack.c.b16 %v148, %v147
    %v181 = vunpack.c.l.b16 %v94
    %v182 = vunpack.c.l.b16 %v95
    %v183 = vunpack.c.l.b16 %v96
    %v184 = vunpack.c.l.b16 %v97
    %v185 = vunpack.c.l.b16 %v98
    %v186 = vunpack.c.l.b16 %v99
    %v187 = vunpack.c.l.b16 %v100
    %v188 = vunpack.c.l.b16 %v101
    %v189 = vunpack.c.l.b16 %v102
    %v190 = vunpack.c.l.b16 %v103
    %v191 = vunpack.c.l.b16 %v104
    %v192 = vunpack.c.l.b16 %v105
    %v193 = vunpack.c.l.b16 %v106
    %v194 = vunpack.c.l.b16 %v107
    %v195 = vunpack.c.l.b16 %v108
    %v196 = vunpack.c.l.b16 %v109
    %v197 = vpack.c.b16 %v182, %v181
    %v198 = vpack.c.b16 %v184, %v183
    %v199 = vpack.c.b16 %v186, %v185
    %v200 = vpack.c.b16 %v188, %v187
    %v201 = vpack.c.b16 %v190, %v189
    %v202 = vpack.c.b16 %v192, %v191
    %v203 = vpack.c.b16 %v194, %v193
    %v204 = vpack.c.b16 %v196, %v195
    %213 = vmatprep.subr.bf16.mxu0 0
    %214 = vmatpush1.bf16.msra.mxu0 %v197
    %215 = vmatprep.subr.bf16.mxu0 0
    %216 = vmatpush1.bf16.msra.mxu0 %v198
    %217 = vmatprep.subr.bf16.mxu0 0
    %218 = vmatpush1.bf16.msra.mxu0 %v199
    %219 = vmatprep.subr.bf16.mxu0 0
    %220 = vmatpush1.bf16.msra.mxu0 %v200
    %221 = vmatprep.subr.bf16.mxu0 0
    %222 = vmatpush1.bf16.msra.mxu0 %v201
    %223 = vmatprep.subr.bf16.mxu0 0
    %224 = vmatpush1.bf16.msra.mxu0 %v202
    %225 = vmatprep.subr.bf16.mxu0 0
    %226 = vmatpush1.bf16.msra.mxu0 %v203
    %227 = vmatprep.subr.bf16.mxu0 0
    %228 = vmatpush1.bf16.msra.mxu0 %v204
    %229 = vmatprep.subr.bf16.mxu0 0
    %230 = vmatpush1.bf16.msra.mxu0 0
    %231 = vmatprep.subr.bf16.mxu0 0
    %232 = vmatpush1.bf16.msra.mxu0 0
    %233 = vmatprep.subr.bf16.mxu0 0
    %234 = vmatpush1.bf16.msra.mxu0 0
    %235 = vmatprep.subr.bf16.mxu0 0
    %236 = vmatpush1.bf16.msra.mxu0 0
    %237 = vmatprep.subr.bf16.mxu0 0
    %238 = vmatpush1.bf16.msra.mxu0 0
    %239 = vmatprep.subr.bf16.mxu0 0
    %240 = vmatpush1.bf16.msra.mxu0 0
    %241 = vmatprep.subr.bf16.mxu0 0
    %242 = vmatpush1.bf16.msra.mxu0 0
    %243 = vmatprep.subr.bf16.mxu0 0
    %244 = vmatpush1.bf16.msra.mxu0 0
    %245 = vmatprep.mubr.bf16.mxu0 0
    %246 = vmatmul.mubr.bf16.gmra.mrb[0].mxu0 %v149
    %v247 = vpop.f32.mrb[0].mxu0
    %v248 = vadd.f32 %v115, %v247
    %v249 = vpop.f32.mrb[0].mxu0
    %v250 = vpop.f32.mrb[0].mxu0
    %v251 = vadd.f32 %v115, %v250
    %v252 = vpop.f32.mrb[0].mxu0
    %253 = vmatprep.mubr.bf16.mxu0 0
    %254 = vmatmul.mubr.bf16.gmra.mrb[0].mxu0 %v150
    %v255 = vpop.f32.mrb[0].mxu0
    %v256 = vadd.f32 %v115, %v255
    %v257 = vpop.f32.mrb[0].mxu0
    %v258 = vpop.f32.mrb[0].mxu0
    %v259 = vadd.f32 %v115, %v258
    %v260 = vpop.f32.mrb[0].mxu0
    %261 = vmatprep.mubr.bf16.mxu0 0
    %262 = vmatmul.mubr.bf16.gmra.mrb[0].mxu0 %v151
    %v263 = vpop.f32.mrb[0].mxu0
    %v264 = vadd.f32 %v115, %v263
    %v265 = vpop.f32.mrb[0].mxu0
    %v266 = vpop.f32.mrb[0].mxu0
    %v267 = vadd.f32 %v115, %v266
    %v268 = vpop.f32.mrb[0].mxu0
    %269 = vmatprep.mubr.bf16.mxu0 0
    %270 = vmatmul.mubr.bf16.gmra.mrb[0].mxu0 %v152
    %v271 = vpop.f32.mrb[0].mxu0
    %v272 = vadd.f32 %v115, %v271
    %v273 = vpop.f32.mrb[0].mxu0
    %v274 = vpop.f32.mrb[0].mxu0
    %v275 = vadd.f32 %v115, %v274
    %v276 = vpop.f32.mrb[0].mxu0
    %277 = vmatprep.mubr.bf16.mxu0 0
    %278 = vmatmul.mubr.bf16.gmra.mrb[0].mxu0 %v153
    %v279 = vpop.f32.mrb[0].mxu0
    %v280 = vadd.f32 %v115, %v279
    %v281 = vpop.f32.mrb[0].mxu0
    %v282 = vpop.f32.mrb[0].mxu0
    %v283 = vadd.f32 %v115, %v282
    %v284 = vpop.f32.mrb[0].mxu0
    %285 = vmatprep.mubr.bf16.mxu0 0
    %286 = vmatmul.mubr.bf16.gmra.mrb[0].mxu0 %v154
    %v287 = vpop.f32.mrb[0].mxu0
    %v288 = vadd.f32 %v115, %v287
    %v289 = vpop.f32.mrb[0].mxu0
    %v290 = vpop.f32.mrb[0].mxu0
    %v291 = vadd.f32 %v115, %v290
    %v292 = vpop.f32.mrb[0].mxu0
    %293 = vmatprep.mubr.bf16.mxu0 0
    %294 = vmatmul.mubr.bf16.gmra.mrb[0].mxu0 %v155
    %v295 = vpop.f32.mrb[0].mxu0
    %v296 = vadd.f32 %v115, %v295
    %v297 = vpop.f32.mrb[0].mxu0
    %v298 = vpop.f32.mrb[0].mxu0
    %v299 = vadd.f32 %v115, %v298
    %v300 = vpop.f32.mrb[0].mxu0
    %301 = vmatprep.mubr.bf16.mxu0 0
    %302 = vmatmul.mubr.bf16.gmra.mrb[0].mxu0 %v156
    %v303 = vpop.f32.mrb[0].mxu0
    %v304 = vadd.f32 %v115, %v303
    %v305 = vpop.f32.mrb[0].mxu0
    %v306 = vpop.f32.mrb[0].mxu0
    %v307 = vadd.f32 %v115, %v306
    %v308 = vpop.f32.mrb[0].mxu0
    %309 = vdwg.mxu0
    %310 = vst [vmem:[#allocation2] sm:$0xff] %v248
    %311 = vst [vmem:[#allocation2 + $0x8] sm:$0xff] %v251
    %312 = vst [vmem:[#allocation2 + $0x10] sm:$0xff] %v256
    %313 = vst [vmem:[#allocation2 + $0x18] sm:$0xff] %v259
    %314 = vst [vmem:[#allocation2 + $0x20] sm:$0xff] %v264
    %315 = vst [vmem:[#allocation2 + $0x28] sm:$0xff] %v267
    %316 = vst [vmem:[#allocation2 + $0x30] sm:$0xff] %v272
    %317 = vst [vmem:[#allocation2 + $0x38] sm:$0xff] %v275
    %318 = vst [vmem:[#allocation2 + $0x40] sm:$0xff] %v280
    %319 = vst [vmem:[#allocation2 + $0x48] sm:$0xff] %v283
    %320 = vst [vmem:[#allocation2 + $0x50] sm:$0xff] %v288
    %321 = vst [vmem:[#allocation2 + $0x58] sm:$0xff] %v291
    %322 = vst [vmem:[#allocation2 + $0x60] sm:$0xff] %v296
    %323 = vst [vmem:[#allocation2 + $0x68] sm:$0xff] %v299
    %324 = vst [vmem:[#allocation2 + $0x70] sm:$0xff] %v304
    %325 = vst [vmem:[#allocation2 + $0x78] sm:$0xff] %v307
    %v326 = vld [vmem:[#allocation11] sm:$0xff]
    %v327 = vld [vmem:[#allocation11 + $0x8] sm:$0xff]
    %v328 = vld [vmem:[#allocation9] sm:$0xf]
    %v329 = vld [vmem:[#allocation9 + $0x4] sm:$0xf]
    %v330 = vld [vmem:[#allocation9 + $0x8] sm:$0xf]
    %v331 = vld [vmem:[#allocation9 + $0xc] sm:$0xf]
    %v332 = vld [vmem:[#allocation9 + $0x10] sm:$0xf]
    %v333 = vld [vmem:[#allocation9 + $0x14] sm:$0xf]
    %v334 = vld [vmem:[#allocation9 + $0x18] sm:$0xf]
    %v335 = vld [vmem:[#allocation9 + $0x1c] sm:$0xf]
    %v336 = vld [vmem:[#allocation9 + $0x20] sm:$0xf]
    %v337 = vld [vmem:[#allocation9 + $0x24] sm:$0xf]
    %v338 = vld [vmem:[#allocation9 + $0x28] sm:$0xf]
    %v339 = vld [vmem:[#allocation9 + $0x2c] sm:$0xf]
    %v340 = vld [vmem:[#allocation9 + $0x30] sm:$0xf]
    %v341 = vld [vmem:[#allocation9 + $0x34] sm:$0xf]
    %v342 = vld [vmem:[#allocation9 + $0x38] sm:$0xf]
    %v343 = vld [vmem:[#allocation9 + $0x3c] sm:$0xf]
    %v344 = vpack.c.bf16 %v327, %v326
    %v361 = vunpack.c.l.b16 %v328
    %v362 = vunpack.c.l.b16 %v329
    %v363 = vunpack.c.l.b16 %v330
    %v364 = vunpack.c.l.b16 %v331
    %v365 = vunpack.c.l.b16 %v332
    %v366 = vunpack.c.l.b16 %v333
    %v367 = vunpack.c.l.b16 %v334
    %v368 = vunpack.c.l.b16 %v335
    %v369 = vunpack.c.l.b16 %v336
    %v370 = vunpack.c.l.b16 %v337
    %v371 = vunpack.c.l.b16 %v338
    %v372 = vunpack.c.l.b16 %v339
    %v373 = vunpack.c.l.b16 %v340
    %v374 = vunpack.c.l.b16 %v341
    %v375 = vunpack.c.l.b16 %v342
    %v376 = vunpack.c.l.b16 %v343
    %v377 = vpack.c.b16 %v362, %v361
    %v378 = vpack.c.b16 %v364, %v363
    %v379 = vpack.c.b16 %v366, %v365
    %v380 = vpack.c.b16 %v368, %v367
    %v381 = vpack.c.b16 %v370, %v369
    %v382 = vpack.c.b16 %v372, %v371
    %v383 = vpack.c.b16 %v374, %v373
    %v384 = vpack.c.b16 %v376, %v375
    %393 = vmatprep.subr.bf16.mxu0 0
    %394 = vmatpush1.bf16.msra.mxu0 %v377
    %395 = vmatprep.subr.bf16.mxu0 0
    %396 = vmatpush1.bf16.msra.mxu0 %v378
    %397 = vmatprep.subr.bf16.mxu0 0
    %398 = vmatpush1.bf16.msra.mxu0 %v379
    %399 = vmatprep.subr.bf16.mxu0 0
    %400 = vmatpush1.bf16.msra.mxu0 %v380
    %401 = vmatprep.subr.bf16.mxu0 0
    %402 = vmatpush1.bf16.msra.mxu0 %v381
    %403 = vmatprep.subr.bf16.mxu0 0
    %404 = vmatpush1.bf16.msra.mxu0 %v382
    %405 = vmatprep.subr.bf16.mxu0 0
    %406 = vmatpush1.bf16.msra.mxu0 %v383
    %407 = vmatprep.subr.bf16.mxu0 0
    %408 = vmatpush1.bf16.msra.mxu0 %v384
    %409 = vmatprep.subr.bf16.mxu0 0
    %410 = vmatpush1.bf16.msra.mxu0 0
    %411 = vmatprep.subr.bf16.mxu0 0
    %412 = vmatpush1.bf16.msra.mxu0 0
    %413 = vmatprep.subr.bf16.mxu0 0
    %414 = vmatpush1.bf16.msra.mxu0 0
    %415 = vmatprep.subr.bf16.mxu0 0
    %416 = vmatpush1.bf16.msra.mxu0 0
    %417 = vmatprep.subr.bf16.mxu0 0
    %418 = vmatpush1.bf16.msra.mxu0 0
    %419 = vmatprep.subr.bf16.mxu0 0
    %420 = vmatpush1.bf16.msra.mxu0 0
    %421 = vmatprep.subr.bf16.mxu0 0
    %422 = vmatpush1.bf16.msra.mxu0 0
    %423 = vmatprep.subr.bf16.mxu0 0
    %424 = vmatpush1.bf16.msra.mxu0 0
    %425 = vmatprep.mubr.bf16.mxu0 0
    %426 = vmatmul.mubr.bf16.gmra.mrb[0].mxu0 %v344
    %v427 = vpop.f32.mrb[0].mxu0
    %v428 = vadd.f32 0.0, %v427
    %v429 = vpop.f32.mrb[0].mxu0
    %v430 = vpop.f32.mrb[0].mxu0
    %v431 = vadd.f32 0.0, %v430
    %v432 = vpop.f32.mrb[0].mxu0
    %433 = vdwg.mxu0
    %v434 = vld [vmem:[#allocation2] sm:$0xff]
    %v435 = vld [vmem:[#allocation2 + $0x8] sm:$0xff]
    %v436 = vadd.f32 %v434, %v428
    %v437 = vadd.f32 %v435, %v431
    %v438 = vtanh.pop %v436
    %v439 = vtanh.pop %v437
    %v440 = vpack.c.bf16 %v439, %v438
    %441 = vmatprep.subr.bf16.mxu0 0
    %442 = vmatpush1.bf16.msra.mxu0 %v377
    %443 = vmatprep.subr.bf16.mxu0 0
    %444 = vmatpush1.bf16.msra.mxu0 %v378
    %445 = vmatprep.subr.bf16.mxu0 0
    %446 = vmatpush1.bf16.msra.mxu0 %v379
    %447 = vmatprep.subr.bf16.mxu0 0
    %448 = vmatpush1.bf16.msra.mxu0 %v380
    %449 = vmatprep.subr.bf16.mxu0 0
    %450 = vmatpush1.bf16.msra.mxu0 %v381
    %451 = vmatprep.subr.bf16.mxu0 0
    %452 = vmatpush1.bf16.msra.mxu0 %v382
    %453 = vmatprep.subr.bf16.mxu0 0
    %454 = vmatpush1.bf16.msra.mxu0 %v383
    %455 = vmatprep.subr.bf16.mxu0 0
    %456 = vmatpush1.bf16.msra.mxu0 %v384
    %457 = vmatprep.subr.bf16.mxu0 0
    %458 = vmatpush1.bf16.msra.mxu0 0
    %459 = vmatprep.subr.bf16.mxu0 0
    %460 = vmatpush1.bf16.msra.mxu0 0
    %461 = vmatprep.subr.bf16.mxu0 0
    %462 = vmatpush1.bf16.msra.mxu0 0
    %463 = vmatprep.subr.bf16.mxu0 0
    %464 = vmatpush1.bf16.msra.mxu0 0
    %465 = vmatprep.subr.bf16.mxu0 0
    %466 = vmatpush1.bf16.msra.mxu0 0
    %467 = vmatprep.subr.bf16.mxu0 0
    %468 = vmatpush1.bf16.msra.mxu0 0
    %469 = vmatprep.subr.bf16.mxu0 0
    %470 = vmatpush1.bf16.msra.mxu0 0
    %471 = vmatprep.subr.bf16.mxu0 0
    %472 = vmatpush1.bf16.msra.mxu0 0
    %473 = vmatprep.mubr.bf16.mxu0 0
    %474 = vmatmul.mubr.bf16.gmra.mrb[0].mxu0 %v440
    %v475 = vpop.f32.mrb[0].mxu0
    %v476 = vadd.f32 0.0, %v475
    %v477 = vpop.f32.mrb[0].mxu0
    %v478 = vpop.f32.mrb[0].mxu0
    %v479 = vadd.f32 0.0, %v478
    %v480 = vpop.f32.mrb[0].mxu0
    %481 = vdwg.mxu0
    %s482 = scalar_lea.vmem [#allocation2], 16
    %v483 = vld [vmem:[%s482] sm:$0xff]
    %v484 = vld [vmem:[%s482 + $0x8] sm:$0xff]
    %v485 = vadd.f32 %v483, %v476
    %v486 = vadd.f32 %v484, %v479
    %v487 = vtanh.pop %v485
    %v488 = vtanh.pop %v486
    %v489 = vpack.c.bf16 %v488, %v487
    %490 = vmatprep.subr.bf16.mxu0 0
    %491 = vmatpush1.bf16.msra.mxu0 %v377
    %492 = vmatprep.subr.bf16.mxu0 0
    %493 = vmatpush1.bf16.msra.mxu0 %v378
    %494 = vmatprep.subr.bf16.mxu0 0
    %495 = vmatpush1.bf16.msra.mxu0 %v379
    %496 = vmatprep.subr.bf16.mxu0 0
    %497 = vmatpush1.bf16.msra.mxu0 %v380
    %498 = vmatprep.subr.bf16.mxu0 0
    %499 = vmatpush1.bf16.msra.mxu0 %v381
    %500 = vmatprep.subr.bf16.mxu0 0
    %501 = vmatpush1.bf16.msra.mxu0 %v382
    %502 = vmatprep.subr.bf16.mxu0 0
    %503 = vmatpush1.bf16.msra.mxu0 %v383
    %504 = vmatprep.subr.bf16.mxu0 0
    %505 = vmatpush1.bf16.msra.mxu0 %v384
    %506 = vmatprep.subr.bf16.mxu0 0
    %507 = vmatpush1.bf16.msra.mxu0 0
    %508 = vmatprep.subr.bf16.mxu0 0
    %509 = vmatpush1.bf16.msra.mxu0 0
    %510 = vmatprep.subr.bf16.mxu0 0
    %511 = vmatpush1.bf16.msra.mxu0 0
    %512 = vmatprep.subr.bf16.mxu0 0
    %513 = vmatpush1.bf16.msra.mxu0 0
    %514 = vmatprep.subr.bf16.mxu0 0
    %515 = vmatpush1.bf16.msra.mxu0 0
    %516 = vmatprep.subr.bf16.mxu0 0
    %517 = vmatpush1.bf16.msra.mxu0 0
    %518 = vmatprep.subr.bf16.mxu0 0
    %519 = vmatpush1.bf16.msra.mxu0 0
    %520 = vmatprep.subr.bf16.mxu0 0
    %521 = vmatpush1.bf16.msra.mxu0 0
    %522 = vmatprep.mubr.bf16.mxu0 0
    %523 = vmatmul.mubr.bf16.gmra.mrb[0].mxu0 %v489
    %v524 = vpop.f32.mrb[0].mxu0
    %v525 = vadd.f32 0.0, %v524
    %v526 = vpop.f32.mrb[0].mxu0
    %v527 = vpop.f32.mrb[0].mxu0
    %v528 = vadd.f32 0.0, %v527
    %v529 = vpop.f32.mrb[0].mxu0
    %530 = vdwg.mxu0
    %s531 = scalar_lea.vmem [#allocation2], 32
    %v532 = vld [vmem:[%s531] sm:$0xff]
    %v533 = vld [vmem:[%s531 + $0x8] sm:$0xff]
    %v534 = vadd.f32 %v532, %v525
    %v535 = vadd.f32 %v533, %v528
    %v536 = vtanh.pop %v534
    %v537 = vtanh.pop %v535
    %v538 = vpack.c.bf16 %v537, %v536
    %539 = vmatprep.subr.bf16.mxu0 0
    %540 = vmatpush1.bf16.msra.mxu0 %v377
    %541 = vmatprep.subr.bf16.mxu0 0
    %542 = vmatpush1.bf16.msra.mxu0 %v378
    %543 = vmatprep.subr.bf16.mxu0 0
    %544 = vmatpush1.bf16.msra.mxu0 %v379
    %545 = vmatprep.subr.bf16.mxu0 0
    %546 = vmatpush1.bf16.msra.mxu0 %v380
    %547 = vmatprep.subr.bf16.mxu0 0
    %548 = vmatpush1.bf16.msra.mxu0 %v381
    %549 = vmatprep.subr.bf16.mxu0 0
    %550 = vmatpush1.bf16.msra.mxu0 %v382
    %551 = vmatprep.subr.bf16.mxu0 0
    %552 = vmatpush1.bf16.msra.mxu0 %v383
    %553 = vmatprep.subr.bf16.mxu0 0
    %554 = vmatpush1.bf16.msra.mxu0 %v384
    %555 = vmatprep.subr.bf16.mxu0 0
    %556 = vmatpush1.bf16.msra.mxu0 0
    %557 = vmatprep.subr.bf16.mxu0 0
    %558 = vmatpush1.bf16.msra.mxu0 0
    %559 = vmatprep.subr.bf16.mxu0 0
    %560 = vmatpush1.bf16.msra.mxu0 0
    %561 = vmatprep.subr.bf16.mxu0 0
    %562 = vmatpush1.bf16.msra.mxu0 0
    %563 = vmatprep.subr.bf16.mxu0 0
    %564 = vmatpush1.bf16.msra.mxu0 0
    %565 = vmatprep.subr.bf16.mxu0 0
    %566 = vmatpush1.bf16.msra.mxu0 0
    %567 = vmatprep.subr.bf16.mxu0 0
    %568 = vmatpush1.bf16.msra.mxu0 0
    %569 = vmatprep.subr.bf16.mxu0 0
    %570 = vmatpush1.bf16.msra.mxu0 0
    %571 = vmatprep.mubr.bf16.mxu0 0
    %572 = vmatmul.mubr.bf16.gmra.mrb[0].mxu0 %v538
    %v573 = vpop.f32.mrb[0].mxu0
    %v574 = vadd.f32 0.0, %v573
    %v575 = vpop.f32.mrb[0].mxu0
    %v576 = vpop.f32.mrb[0].mxu0
    %v577 = vadd.f32 0.0, %v576
    %v578 = vpop.f32.mrb[0].mxu0
    %579 = vdwg.mxu0
    %s580 = scalar_lea.vmem [#allocation2], 48
    %v581 = vld [vmem:[%s580] sm:$0xff]
    %v582 = vld [vmem:[%s580 + $0x8] sm:$0xff]
    %v583 = vadd.f32 %v581, %v574
    %v584 = vadd.f32 %v582, %v577
    %v585 = vtanh.pop %v583
    %v586 = vtanh.pop %v584
    %v587 = vpack.c.bf16 %v586, %v585
    %588 = vmatprep.subr.bf16.mxu0 0
    %589 = vmatpush1.bf16.msra.mxu0 %v377
    %590 = vmatprep.subr.bf16.mxu0 0
    %591 = vmatpush1.bf16.msra.mxu0 %v378
    %592 = vmatprep.subr.bf16.mxu0 0
    %593 = vmatpush1.bf16.msra.mxu0 %v379
    %594 = vmatprep.subr.bf16.mxu0 0
    %595 = vmatpush1.bf16.msra.mxu0 %v380
    %596 = vmatprep.subr.bf16.mxu0 0
    %597 = vmatpush1.bf16.msra.mxu0 %v381
    %598 = vmatprep.subr.bf16.mxu0 0
    %599 = vmatpush1.bf16.msra.mxu0 %v382
    %600 = vmatprep.subr.bf16.mxu0 0
    %601 = vmatpush1.bf16.msra.mxu0 %v383
    %602 = vmatprep.subr.bf16.mxu0 0
    %603 = vmatpush1.bf16.msra.mxu0 %v384
    %604 = vmatprep.subr.bf16.mxu0 0
    %605 = vmatpush1.bf16.msra.mxu0 0
    %606 = vmatprep.subr.bf16.mxu0 0
    %607 = vmatpush1.bf16.msra.mxu0 0
    %608 = vmatprep.subr.bf16.mxu0 0
    %609 = vmatpush1.bf16.msra.mxu0 0
    %610 = vmatprep.subr.bf16.mxu0 0
    %611 = vmatpush1.bf16.msra.mxu0 0
    %612 = vmatprep.subr.bf16.mxu0 0
    %613 = vmatpush1.bf16.msra.mxu0 0
    %614 = vmatprep.subr.bf16.mxu0 0
    %615 = vmatpush1.bf16.msra.mxu0 0
    %616 = vmatprep.subr.bf16.mxu0 0
    %617 = vmatpush1.bf16.msra.mxu0 0
    %618 = vmatprep.subr.bf16.mxu0 0
    %619 = vmatpush1.bf16.msra.mxu0 0
    %620 = vmatprep.mubr.bf16.mxu0 0
    %621 = vmatmul.mubr.bf16.gmra.mrb[0].mxu0 %v587
    %v622 = vpop.f32.mrb[0].mxu0
    %v623 = vadd.f32 0.0, %v622
    %v624 = vpop.f32.mrb[0].mxu0
    %v625 = vpop.f32.mrb[0].mxu0
    %v626 = vadd.f32 0.0, %v625
    %v627 = vpop.f32.mrb[0].mxu0
    %628 = vdwg.mxu0
    %s629 = scalar_lea.vmem [#allocation2], 64
    %v630 = vld [vmem:[%s629] sm:$0xff]
    %v631 = vld [vmem:[%s629 + $0x8] sm:$0xff]
    %v632 = vadd.f32 %v630, %v623
    %v633 = vadd.f32 %v631, %v626
    %v634 = vtanh.pop %v632
    %v635 = vtanh.pop %v633
    %v636 = vpack.c.bf16 %v635, %v634
    %637 = vmatprep.subr.bf16.mxu0 0
    %638 = vmatpush1.bf16.msra.mxu0 %v377
    %639 = vmatprep.subr.bf16.mxu0 0
    %640 = vmatpush1.bf16.msra.mxu0 %v378
    %641 = vmatprep.subr.bf16.mxu0 0
    %642 = vmatpush1.bf16.msra.mxu0 %v379
    %643 = vmatprep.subr.bf16.mxu0 0
    %644 = vmatpush1.bf16.msra.mxu0 %v380
    %645 = vmatprep.subr.bf16.mxu0 0
    %646 = vmatpush1.bf16.msra.mxu0 %v381
    %647 = vmatprep.subr.bf16.mxu0 0
    %648 = vmatpush1.bf16.msra.mxu0 %v382
    %649 = vmatprep.subr.bf16.mxu0 0
    %650 = vmatpush1.bf16.msra.mxu0 %v383
    %651 = vmatprep.subr.bf16.mxu0 0
    %652 = vmatpush1.bf16.msra.mxu0 %v384
    %653 = vmatprep.subr.bf16.mxu0 0
    %654 = vmatpush1.bf16.msra.mxu0 0
    %655 = vmatprep.subr.bf16.mxu0 0
    %656 = vmatpush1.bf16.msra.mxu0 0
    %657 = vmatprep.subr.bf16.mxu0 0
    %658 = vmatpush1.bf16.msra.mxu0 0
    %659 = vmatprep.subr.bf16.mxu0 0
    %660 = vmatpush1.bf16.msra.mxu0 0
    %661 = vmatprep.subr.bf16.mxu0 0
    %662 = vmatpush1.bf16.msra.mxu0 0
    %663 = vmatprep.subr.bf16.mxu0 0
    %664 = vmatpush1.bf16.msra.mxu0 0
    %665 = vmatprep.subr.bf16.mxu0 0
    %666 = vmatpush1.bf16.msra.mxu0 0
    %667 = vmatprep.subr.bf16.mxu0 0
    %668 = vmatpush1.bf16.msra.mxu0 0
    %669 = vmatprep.mubr.bf16.mxu0 0
    %670 = vmatmul.mubr.bf16.gmra.mrb[0].mxu0 %v636
    %v671 = vpop.f32.mrb[0].mxu0
    %v672 = vadd.f32 0.0, %v671
    %v673 = vpop.f32.mrb[0].mxu0
    %v674 = vpop.f32.mrb[0].mxu0
    %v675 = vadd.f32 0.0, %v674
    %v676 = vpop.f32.mrb[0].mxu0
    %677 = vdwg.mxu0
    %s678 = scalar_lea.vmem [#allocation2], 80
    %v679 = vld [vmem:[%s678] sm:$0xff]
    %v680 = vld [vmem:[%s678 + $0x8] sm:$0xff]
    %v681 = vadd.f32 %v679, %v672
    %v682 = vadd.f32 %v680, %v675
    %v683 = vtanh.pop %v681
    %v684 = vtanh.pop %v682
    %v685 = vpack.c.bf16 %v684, %v683
    %686 = vmatprep.subr.bf16.mxu0 0
    %687 = vmatpush1.bf16.msra.mxu0 %v377
    %688 = vmatprep.subr.bf16.mxu0 0
    %689 = vmatpush1.bf16.msra.mxu0 %v378
    %690 = vmatprep.subr.bf16.mxu0 0
    %691 = vmatpush1.bf16.msra.mxu0 %v379
    %692 = vmatprep.subr.bf16.mxu0 0
    %693 = vmatpush1.bf16.msra.mxu0 %v380
    %694 = vmatprep.subr.bf16.mxu0 0
    %695 = vmatpush1.bf16.msra.mxu0 %v381
    %696 = vmatprep.subr.bf16.mxu0 0
    %697 = vmatpush1.bf16.msra.mxu0 %v382
    %698 = vmatprep.subr.bf16.mxu0 0
    %699 = vmatpush1.bf16.msra.mxu0 %v383
    %700 = vmatprep.subr.bf16.mxu0 0
    %701 = vmatpush1.bf16.msra.mxu0 %v384
    %702 = vmatprep.subr.bf16.mxu0 0
    %703 = vmatpush1.bf16.msra.mxu0 0
    %704 = vmatprep.subr.bf16.mxu0 0
    %705 = vmatpush1.bf16.msra.mxu0 0
    %706 = vmatprep.subr.bf16.mxu0 0
    %707 = vmatpush1.bf16.msra.mxu0 0
    %708 = vmatprep.subr.bf16.mxu0 0
    %709 = vmatpush1.bf16.msra.mxu0 0
    %710 = vmatprep.subr.bf16.mxu0 0
    %711 = vmatpush1.bf16.msra.mxu0 0
    %712 = vmatprep.subr.bf16.mxu0 0
    %713 = vmatpush1.bf16.msra.mxu0 0
    %714 = vmatprep.subr.bf16.mxu0 0
    %715 = vmatpush1.bf16.msra.mxu0 0
    %716 = vmatprep.subr.bf16.mxu0 0
    %717 = vmatpush1.bf16.msra.mxu0 0
    %718 = vmatprep.mubr.bf16.mxu0 0
    %719 = vmatmul.mubr.bf16.gmra.mrb[0].mxu0 %v685
    %v720 = vpop.f32.mrb[0].mxu0
    %v721 = vadd.f32 0.0, %v720
    %v722 = vpop.f32.mrb[0].mxu0
    %v723 = vpop.f32.mrb[0].mxu0
    %v724 = vadd.f32 0.0, %v723
    %v725 = vpop.f32.mrb[0].mxu0
    %726 = vdwg.mxu0
    %s727 = scalar_lea.vmem [#allocation2], 96
    %v728 = vld [vmem:[%s727] sm:$0xff]
    %v729 = vld [vmem:[%s727 + $0x8] sm:$0xff]
    %v730 = vadd.f32 %v728, %v721
    %v731 = vadd.f32 %v729, %v724
    %v732 = vtanh.pop %v730
    %v733 = vtanh.pop %v731
    %v734 = vpack.c.bf16 %v733, %v732
    %735 = vmatprep.subr.bf16.mxu0 0
    %736 = vmatpush1.bf16.msra.mxu0 %v377
    %737 = vmatprep.subr.bf16.mxu0 0
    %738 = vmatpush1.bf16.msra.mxu0 %v378
    %739 = vmatprep.subr.bf16.mxu0 0
    %740 = vmatpush1.bf16.msra.mxu0 %v379
    %741 = vmatprep.subr.bf16.mxu0 0
    %742 = vmatpush1.bf16.msra.mxu0 %v380
    %743 = vmatprep.subr.bf16.mxu0 0
    %744 = vmatpush1.bf16.msra.mxu0 %v381
    %745 = vmatprep.subr.bf16.mxu0 0
    %746 = vmatpush1.bf16.msra.mxu0 %v382
    %747 = vmatprep.subr.bf16.mxu0 0
    %748 = vmatpush1.bf16.msra.mxu0 %v383
    %749 = vmatprep.subr.bf16.mxu0 0
    %750 = vmatpush1.bf16.msra.mxu0 %v384
    %751 = vmatprep.subr.bf16.mxu0 0
    %752 = vmatpush1.bf16.msra.mxu0 0
    %753 = vmatprep.subr.bf16.mxu0 0
    %754 = vmatpush1.bf16.msra.mxu0 0
    %755 = vmatprep.subr.bf16.mxu0 0
    %756 = vmatpush1.bf16.msra.mxu0 0
    %757 = vmatprep.subr.bf16.mxu0 0
    %758 = vmatpush1.bf16.msra.mxu0 0
    %759 = vmatprep.subr.bf16.mxu0 0
    %760 = vmatpush1.bf16.msra.mxu0 0
    %761 = vmatprep.subr.bf16.mxu0 0
    %762 = vmatpush1.bf16.msra.mxu0 0
    %763 = vmatprep.subr.bf16.mxu0 0
    %764 = vmatpush1.bf16.msra.mxu0 0
    %765 = vmatprep.subr.bf16.mxu0 0
    %766 = vmatpush1.bf16.msra.mxu0 0
    %767 = vmatprep.mubr.bf16.mxu0 0
    %768 = vmatmul.mubr.bf16.gmra.mrb[0].mxu0 %v734
    %v769 = vpop.f32.mrb[0].mxu0
    %v770 = vadd.f32 0.0, %v769
    %v771 = vpop.f32.mrb[0].mxu0
    %v772 = vpop.f32.mrb[0].mxu0
    %v773 = vadd.f32 0.0, %v772
    %v774 = vpop.f32.mrb[0].mxu0
    %775 = vdwg.mxu0
    %s776 = scalar_lea.vmem [#allocation2], 112
    %v777 = vld [vmem:[%s776] sm:$0xff]
    %v778 = vld [vmem:[%s776 + $0x8] sm:$0xff]
    %v779 = vadd.f32 %v777, %v770
    %v780 = vadd.f32 %v778, %v773
    %v781 = vtanh.pop %v779
    %v782 = vtanh.pop %v780
    %783 = vst [vmem:[#allocation11] sm:$0xff] %v781
    %784 = vst [vmem:[#allocation11 + $0x8] sm:$0xff] %v782
    // Predicated region
    $region38: #{tpu_custom_call.1} parent=1 // pred_check
      _
    $region39: #{tpu_custom_call.1} parent=1 // pred_check_branch
      %786 = sbr.rel (0) target = $region41
    $region40: #{tpu_custom_call.1} parent=1 // pred_region
      %s788 = ssub.s32 256, 256
      %789 = vsyncadd [#allocation5], %s788
      %s790 = sshll.u32 [#allocation11], 4
      %s791 = int_to_ptr.vmem [resolvable:$true] %s790
      %796 = dma.vmem_to_hbm [thread:$0]  %s791, 256, %s4, [#allocation5], 128, 128, 8
    $region41: #{tpu_custom_call.1} parent=1 // pred_fallthru
      _
    // Predicated region
    $region42: #{tpu_custom_call.1} parent=1 // pred_check
      _
    $region43: #{tpu_custom_call.1} parent=1 // pred_check_branch
      %798 = sbr.rel (0) target = $region45
    $region44: #{tpu_custom_call.1} parent=1 // pred_region
      %799 = dma.done [#allocation5], 256
    $region45: #{tpu_custom_call.1} parent=1 // pred_fallthru
      _
    %800 = vsyncpa [#allocation4], 1
    %801 = vsyncpa [#allocation7], 1
    %802 = vsyncpa [#allocation10], 1
    %803 = vsyncpa [#allocation5], 1

</llo_original>
